<compile_context>
chip_gen: v6e
topology: v6e:2x2x1
jax: 0.10.0
libtpu: 0.0.40
codegen_flags: <defaults>
</compile_context>

<pallas_src>
import jax
import jax.numpy as jnp
from jax.experimental import pallas as pl
from jax.experimental.pallas import tpu as pltpu


def _copy_half_kernel(x_ref, out_ref):
    # x_ref / out_ref: (TS, H) VMEM tiles.  The grid's second axis selects
    # which half of the (R, 2H) output this block lands in.
    out_ref[...] = x_ref[...]


def _concat_kernel(x_ref, out_ref):
    # x_ref: (TS, H), out_ref: (TS, 2H).  One full-width store of [x, x].
    x = x_ref[...]
    out_ref[...] = jnp.concatenate([x, x], axis=-1)


def _pick_row_tile(rows, h, dtype_bytes, lane_aligned):
    """Largest row tile that keeps double-buffered tiles well inside VMEM."""
    budget_bytes = 16 * 1024 * 1024  # comfortably under the 32 MiB scoped default
    # Aligned path: (TS, H) input + (TS, H) output, double-buffered -> 4x.
    # Fallback path: (TS, H) input + (TS, 2H) output, double-buffered -> 6x.
    per_row = (4 if lane_aligned else 6) * h * dtype_bytes
    ts = budget_bytes // max(per_row, 1)
    ts = int(min(ts, 2048, rows))
    if ts >= rows:
        return rows
    # Keep the sublane dim packing-friendly for f32/bf16/int8 (multiple of 32).
    return max(32, (ts // 32) * 32)


def bond_attention_fixed(x, one_way: bool = True, is_padded: bool = False):
    """Pallas implementation of BondAttentionFixed.forward.

    `one_way` / `is_padded` / bond indices are accepted for API parity but have
    no effect: the PyTorch forward returns cat([x, x], 2) before the scatter
    loop runs (dead code).
    """
    B, S, H = x.shape
    R = B * S
    xf = x.reshape(R, H)  # flatten (batch, seq) -> one row axis
    dtype_bytes = jnp.dtype(x.dtype).itemsize
    lane_aligned = (H % 128) == 0

    ts = _pick_row_tile(R, H, dtype_bytes, lane_aligned)
    n_row_tiles = pl.cdiv(R, ts)

    if lane_aligned:
        out = pl.pallas_call(
            _copy_half_kernel,
            out_shape=jax.ShapeDtypeStruct((R, 2 * H), x.dtype),
            grid_spec=pltpu.PrefetchScalarGridSpec(
                num_scalar_prefetch=0,
                grid=(n_row_tiles, 2),
                in_specs=[pl.BlockSpec((ts, H), lambda i, c: (i, 0))],
                out_specs=pl.BlockSpec((ts, H), lambda i, c: (i, c)),
            ),
            compiler_params=pltpu.CompilerParams(
                dimension_semantics=("parallel", "arbitrary"),
            ),
        )(xf)
    else:
        out = pl.pallas_call(
            _concat_kernel,
            out_shape=jax.ShapeDtypeStruct((R, 2 * H), x.dtype),
            grid_spec=pltpu.PrefetchScalarGridSpec(
                num_scalar_prefetch=0,
                grid=(n_row_tiles,),
                in_specs=[pl.BlockSpec((ts, H), lambda i: (i, 0))],
                out_specs=pl.BlockSpec((ts, 2 * H), lambda i: (i, 0)),
            ),
            compiler_params=pltpu.CompilerParams(
                dimension_semantics=("parallel",),
            ),
        )(xf)

    return out.reshape(B, S, 2 * H)


if __name__ == "__main__":
    key = jax.random.PRNGKey(0)

    # Small (batch, seq, hidden) shape implied by the module — exercises the
    # unaligned (single full-width concat store) path.
    B, S, H = 2, 8, 32
    x = jax.random.normal(key, (B, S, H), dtype=jnp.float32)
    out = jax.block_until_ready(bond_attention_fixed(x, one_way=True))
    ref = jnp.concatenate([x, x], axis=2)
    assert out.shape == (B, S, 2 * H)
    assert jnp.allclose(out, ref), "mismatch vs. reference (unaligned path)"

    # Lane-aligned shape — exercises the 2-wide grid, lane-dense store path.
    B2, S2, H2 = 2, 64, 128
    x2 = jax.random.normal(jax.random.PRNGKey(0), (B2, S2, H2), dtype=jnp.float32)
    out2 = jax.block_until_ready(bond_attention_fixed(x2, one_way=True))
    ref2 = jnp.concatenate([x2, x2], axis=2)
    assert out2.shape == (B2, S2, 2 * H2)
    assert jnp.allclose(out2, ref2), "mismatch vs. reference (aligned path)"

    # TODO(synk): the scatter loop after the early return in the PyTorch
    # forward is dead code and intentionally not implemented.
    print("KERNEL_OK")
</pallas_src>

<mosaic_0001>
module attributes {stable_mosaic.version = 11 : i64} {
  func.func @_concat_kernel(%arg0: i32, %arg1: memref<16x32xf32, #tpu.memory_space<vmem>>, %arg2: memref<16x64xf32, #tpu.memory_space<vmem>>) attributes {dimension_semantics = [#tpu.dimension_semantics<parallel>], iteration_bounds = array<i64: 1>, scalar_prefetch = 0 : i64, scratch_operands = 0 : i64, tpu.core_type = #tpu.core_type<tc>, window_params = [{transform_indices = @transform_0, window_bounds = array<i64: 16, 32>}, {transform_indices = @transform_1, window_bounds = array<i64: 16, 64>}]} {
    %c0 = arith.constant 0 : index
    %c0_0 = arith.constant 0 : index
    %0 = vector.load %arg1[%c0, %c0_0] : memref<16x32xf32, #tpu.memory_space<vmem>>, vector<16x32xf32>
    %1 = tpu.concatenate %0, %0 in 1 : vector<16x32xf32>, vector<16x32xf32> -> vector<16x64xf32>
    %c0_1 = arith.constant 0 : index
    %c0_2 = arith.constant 0 : index
    %2 = vector.load %arg2[%c0_1, %c0_2] : memref<16x64xf32, #tpu.memory_space<vmem>>, vector<16x64xf32>
    tpu.vector_store %arg2[%c0_1, %c0_2], %1 {strides = array<i32>} : memref<16x64xf32, #tpu.memory_space<vmem>>, vector<16x64xf32>,
    return
  }
  func.func @transform_0(%arg0: i32) -> (i32, i32) {
    %c0_i32 = arith.constant 0 : i32
    %c0_i32_0 = arith.constant 0 : i32
    return %arg0, %c0_i32 : i32, i32
  }
  func.func @transform_1(%arg0: i32) -> (i32, i32) {
    %c0_i32 = arith.constant 0 : i32
    %c0_i32_0 = arith.constant 0 : i32
    return %arg0, %c0_i32 : i32, i32
  }
}

</mosaic_0001>

<llo_original>
// kernel: tpu_custom_call.1
$region0: #{tpu_custom_call.1}
  #allocation0 [shape = 'u32[]', space=smem, size = 0x4, offset = 0x4, fixed_abs, tag = 'smem constant byte address 0x4 - core index']
  #allocation1 [shape = 'u32[144,128]{1,0:T(1,128)}', space=vmem, size = 0x12000, scoped, tag = 'internal scratch']
  %s0 = inlined_call_operand.hbm [shape: f32[16,32], index: 0, kind: input, shape index: {}]
  %s1 = inlined_call_operand.hbm [shape: f32[16,64], index: 1, kind: output, shape index: {}]
  %s2 = sld [smem:[#allocation0]]
  $region18: #{tpu_custom_call.1} parent=0
    _
  %s4 = ssub.s32 1, %s2
  %s5 = scalar_select 0, %s4, %s2
  $region1: #{tpu_custom_call.1} parent=0
    #allocation2 [shape = 'u8[8192]{0}', space=vmem, size = 0x2000, scoped, tag = 'input window, operand 0, single buffered']
    #allocation3 [shape = 's32[1]{0}', space=sflag, size = 0x4, scoped, tag = 'scoped memory for tpu_custom_call.1']
    #allocation4 [shape = 's32[1]{0}', space=sflag, size = 0x4, scoped, tag = 'scoped memory for tpu_custom_call.1']
    #allocation5 [shape = 'u8[8192]{0}', space=vmem, size = 0x2000, scoped, tag = 'output window, operand 0, single buffered']
    %6 = vsyncpa [#allocation3], 0
    %7 = vsyncpa [#allocation4], 0
    // Predicated region
    $region2: #{tpu_custom_call.1} parent=1 // pred_check
      _
    $region3: #{tpu_custom_call.1} parent=1 // pred_check_branch
      %9 = sbr.rel (0) target = $region5
    $region4: #{tpu_custom_call.1} parent=1 // pred_region
      %s11 = ssub.s32 256, 256
      %12 = vsyncadd [#allocation3], %s11
      %s13 = sshll.u32 [#allocation2], 4
      %s14 = int_to_ptr.vmem [resolvable:$true] %s13
      %19 = dma.hbm_to_vmem [thread:$0]  %s0, 256, %s14, [#allocation3], 128, 128, 8
    $region5: #{tpu_custom_call.1} parent=1 // pred_fallthru
      _
    // Predicated region
    $region6: #{tpu_custom_call.1} parent=1 // pred_check
      _
    $region7: #{tpu_custom_call.1} parent=1 // pred_check_branch
      %21 = sbr.rel (0) target = $region9
    $region8: #{tpu_custom_call.1} parent=1 // pred_region
      %22 = dma.done [#allocation3], 256
    $region9: #{tpu_custom_call.1} parent=1 // pred_fallthru
      _
    %v23 = vld [vmem:[#allocation2] sm:$0xff]
    %v24 = vld [vmem:[#allocation2 + $0x8] sm:$0xff]
    %27 = vrot.lane.b32.xlu0 %v23, 32
    %v28 = vpop.permute.xlu0 %27
    %29 = vrot.lane.b32.xlu0 %v24, 32
    %v30 = vpop.permute.xlu0 %29
    %vm33 = vcmask 261120
    %v34 = vsel %vm33, %v23, %v28
    %v35 = vsel %vm33, %v24, %v30
    %vm36 = vcmask 523264
    %37 = vst.msk [vmem:[#allocation5] sm:$0xff] %vm36, %v34
    %38 = vst.msk [vmem:[#allocation5 + $0x8] sm:$0xff] %vm36, %v35
    // Predicated region
    $region10: #{tpu_custom_call.1} parent=1 // pred_check
      _
    $region11: #{tpu_custom_call.1} parent=1 // pred_check_branch
      %40 = sbr.rel (0) target = $region13
    $region12: #{tpu_custom_call.1} parent=1 // pred_region
      %s42 = ssub.s32 256, 256
      %43 = vsyncadd [#allocation4], %s42
      %s44 = sshll.u32 [#allocation5], 4
      %s45 = int_to_ptr.vmem [resolvable:$true] %s44
      %50 = dma.vmem_to_hbm [thread:$0]  %s45, 256, %s1, [#allocation4], 128, 128, 8
    $region13: #{tpu_custom_call.1} parent=1 // pred_fallthru
      _
    // Predicated region
    $region14: #{tpu_custom_call.1} parent=1 // pred_check
      _
    $region15: #{tpu_custom_call.1} parent=1 // pred_check_branch
      %52 = sbr.rel (0) target = $region17
    $region16: #{tpu_custom_call.1} parent=1 // pred_region
      %53 = dma.done [#allocation4], 256
    $region17: #{tpu_custom_call.1} parent=1 // pred_fallthru
      _
    %54 = vsyncpa [#allocation3], 1
    %55 = vsyncpa [#allocation4], 1

</llo_original>
